<compile_context>
chip_gen: v7x
topology: tpu7x:2x2x1
jax: 0.10.0
libtpu: 0.0.40
codegen_flags: <defaults>
</compile_context>

<pallas_src>
import functools

import jax
import jax.numpy as jnp
from jax.experimental import pallas as pl
from jax.experimental.pallas import tpu as pltpu


def _focal_loss_kernel(logits_ref, gt_ref, out_ref, *, gamma: float):
    x = logits_ref[...].astype(jnp.float32)                      # (TB, C)
    gt = gt_ref[...]                                              # (TB, 1) int32

    # Numerically-stable log-sum-exp along the class (lane) axis.
    m = jnp.max(x, axis=-1, keepdims=True)                        # (TB, 1)
    denom = jnp.sum(jnp.exp(x - m), axis=-1, keepdims=True)       # (TB, 1)
    lse = m + jnp.log(denom)                                      # (TB, 1)

    # Gather the raw target logit via one-hot mask + lane reduction.
    col = jax.lax.broadcasted_iota(jnp.int32, x.shape, 1)         # (TB, C)
    x_gt = jnp.sum(jnp.where(col == gt, x, 0.0), axis=-1, keepdims=True)

    log_p = x_gt - lse                                            # (TB, 1), <= 0

    # one_minus_p = -expm1(log_p): Taylor branch near 0 avoids catastrophic
    # cancellation of (1 - p) when p -> 1; only uses exp / where so it lowers
    # on Mosaic without depending on an expm1 rule.
    t = log_p
    taylor = -t * (1.0 + t * (0.5 + t * (1.0 / 6.0)))             # -t - t^2/2 - t^3/6
    one_minus_p = jnp.where(t > -1e-2, taylor, 1.0 - jnp.exp(t))

    # Modulating factor (1 - p)^gamma.
    g = float(gamma)
    if g == int(g) and g >= 0:
        mod = jnp.ones_like(log_p)
        for _ in range(int(g)):
            mod = mod * one_minus_p
    else:
        # Non-integer gamma path (not exercised by the demo below).
        mod = jnp.power(one_minus_p, jnp.float32(g))

    out_ref[...] = (-mod * log_p).astype(out_ref.dtype)


def _vmem_limit_bytes() -> int:
    """Scoped-VMEM limit to request: ~3/4 of physical VMEM, capped at 96 MiB."""
    try:
        cap = int(pltpu.get_tpu_info().vmem_capacity_bytes)
    except Exception:
        cap = 64 * 1024 * 1024  # conservative fallback (v7x physical size)
    return int(min(cap * 3 // 4, 96 * 1024 * 1024))


def focal_loss(logits: jax.Array, gt: jax.Array, gamma: float,
               *, block_b: int | None = None) -> jax.Array:
    """Focal loss. logits: (B, C); gt: (B,) or (B, 1) int in [0, C). Returns (B, 1) f32."""
    B, C = logits.shape
    gt = gt.reshape(B, 1).astype(jnp.int32)

    itemsize = jnp.dtype(logits.dtype).itemsize
    # Sublane alignment of the packed input dtype: f32 -> 8, bf16 -> 16, 8-bit -> 32.
    align = max(8, 32 // max(itemsize, 1))
    vmem_limit = _vmem_limit_bytes()

    if block_b is None:
        # Per-row VMEM footprint of one grid step: double-buffered input tile
        # plus generous headroom for full-width f32 temporaries (cast, shifted
        # exp, iota, one-hot select), every row lane-padded to a multiple of 128.
        c_pad = ((C + 127) // 128) * 128
        per_row = c_pad * (2 * itemsize + 6 * 4) + 64
        budget = max(vmem_limit - (4 << 20), 1 << 20)
        tb = max(align, (budget // per_row) // align * align)
    else:
        tb = max(1, int(block_b))

    if B <= align:
        tb = B                                      # single full-array block (always legal)
    else:
        tb = min(tb, (B // align) * align)          # never exceed B; last block may be ragged
        if B >= 2 * align:
            # Keep >= 2 grid steps so both TensorCores get work on dual-core chips.
            half = (-(-B // 2) + align - 1) // align * align
            tb = min(tb, max(half, align))

    grid = pl.cdiv(B, tb)

    cost = pl.CostEstimate(
        flops=6 * B * C,
        transcendentals=B * C + 3 * B,
        bytes_accessed=B * C * itemsize + B * 4 + B * 4,
    )

    kernel = functools.partial(_focal_loss_kernel, gamma=gamma)
    return pl.pallas_call(
        kernel,
        out_shape=jax.ShapeDtypeStruct((B, 1), jnp.float32),
        grid=(grid,),
        in_specs=[
            pl.BlockSpec((tb, C), lambda i: (i, 0)),
            pl.BlockSpec((tb, 1), lambda i: (i, 0)),
        ],
        out_specs=pl.BlockSpec((tb, 1), lambda i: (i, 0)),
        compiler_params=pltpu.CompilerParams(
            dimension_semantics=("parallel",),
            vmem_limit_bytes=vmem_limit,
        ),
        cost_estimate=cost,
    )(logits, gt)


def focal_loss_ref(logits, gt, gamma):
    prob = jax.nn.softmax(logits.astype(jnp.float32), axis=-1)
    p = jnp.take_along_axis(prob, gt.reshape(-1, 1), axis=1)
    return -((1.0 - p) ** gamma) * jnp.log(p)


if __name__ == "__main__":
    gamma = 2.0
    B, C = 8, 32

    key = jax.random.PRNGKey(0)
    k_logits, k_gt = jax.random.split(key)
    logits = jax.random.normal(k_logits, (B, C), dtype=jnp.float32)
    gt = jax.random.randint(k_gt, (B, 1), 0, C, dtype=jnp.int32)

    out = jax.block_until_ready(focal_loss(logits, gt, gamma))
    ref = focal_loss_ref(logits, gt, gamma)
    assert out.shape == (B, 1), out.shape
    assert jnp.allclose(out, ref, atol=1e-5, rtol=1e-5), (out, ref)

    # Ragged batch (not a multiple of the sublane/tile size), handled without
    # any host-side padding copy of the logits.
    B2 = 13
    logits2 = jax.random.normal(k_logits, (B2, C), dtype=jnp.float32)
    gt2 = jax.random.randint(k_gt, (B2,), 0, C, dtype=jnp.int32)
    out2 = jax.block_until_ready(focal_loss(logits2, gt2, gamma))
    ref2 = focal_loss_ref(logits2, gt2, gamma)
    assert out2.shape == (B2, 1), out2.shape
    assert jnp.allclose(out2, ref2, atol=1e-5, rtol=1e-5), (out2, ref2)

    print("KERNEL_OK")
</pallas_src>

<mosaic_0001>
module attributes {stable_mosaic.version = 11 : i64} {
  func.func @_focal_loss_kernel(%arg0: i32, %arg1: memref<8x32xf32, #tpu.memory_space<vmem>>, %arg2: memref<8x1xi32, #tpu.memory_space<vmem>>, %arg3: memref<8x1xf32, #tpu.memory_space<vmem>>) attributes {dimension_semantics = [#tpu.dimension_semantics<parallel>], iteration_bounds = array<i64: 1>, scalar_prefetch = 0 : i64, scratch_operands = 0 : i64, tpu.core_type = #tpu.core_type<tc>, window_params = [{transform_indices = @transform_0, window_bounds = array<i64: 8, 32>}, {transform_indices = @transform_1, window_bounds = array<i64: 8, 1>}, {transform_indices = @transform_2, window_bounds = array<i64: 8, 1>}]} {
    %c0 = arith.constant 0 : index
    %c0_0 = arith.constant 0 : index
    %0 = vector.load %arg1[%c0, %c0_0] : memref<8x32xf32, #tpu.memory_space<vmem>>, vector<8x32xf32>
    %c0_1 = arith.constant 0 : index
    %c0_2 = arith.constant 0 : index
    %1 = vector.load %arg2[%c0_1, %c0_2] : memref<8x1xi32, #tpu.memory_space<vmem>>, vector<8x1xi32>
    %cst = arith.constant dense<0xFF800000> : vector<8xf32>
    %2 = vector.multi_reduction <maximumf>, %0, %cst [1] : vector<8x32xf32> to vector<8xf32>
    %3 = vector.shape_cast %2 : vector<8xf32> to vector<8x1xf32>
    %4 = vector.broadcast %3 : vector<8x1xf32> to vector<8x32xf32>
    %5 = arith.subf %0, %4 : vector<8x32xf32>
    %6 = math.exp %5 : vector<8x32xf32>
    %cst_3 = arith.constant dense<0.000000e+00> : vector<8xf32>
    %7 = vector.multi_reduction <add>, %6, %cst_3 [1] : vector<8x32xf32> to vector<8xf32>
    %8 = vector.shape_cast %7 : vector<8xf32> to vector<8x1xf32>
    %9 = math.log %8 : vector<8x1xf32>
    %10 = arith.addf %3, %9 : vector<8x1xf32>
    %11 = tpu.iota {dimensions = array<i32: 1>} : vector<8x32xi32>
    %12 = vector.broadcast %1 : vector<8x1xi32> to vector<8x32xi32>
    %13 = arith.cmpi eq, %11, %12 : vector<8x32xi32>
    %cst_4 = arith.constant 0.000000e+00 : f32
    %14 = vector.broadcast %cst_4 : f32 to vector<8x32xf32>
    %15 = arith.select %13, %0, %14 : vector<8x32xi1>, vector<8x32xf32>
    %cst_5 = arith.constant dense<0.000000e+00> : vector<8xf32>
    %16 = vector.multi_reduction <add>, %15, %cst_5 [1] : vector<8x32xf32> to vector<8xf32>
    %17 = vector.shape_cast %16 : vector<8xf32> to vector<8x1xf32>
    %18 = arith.subf %17, %10 : vector<8x1xf32>
    %cst_6 = arith.constant 0.000000e+00 : f32
    %19 = vector.broadcast %cst_6 : f32 to vector<8x1xf32>
    %20 = arith.subf %19, %18 : vector<8x1xf32>
    %cst_7 = arith.constant 0.166666672 : f32
    %21 = vector.broadcast %cst_7 : f32 to vector<8x1xf32>
    %22 = arith.mulf %18, %21 : vector<8x1xf32>
    %cst_8 = arith.constant 5.000000e-01 : f32
    %23 = vector.broadcast %cst_8 : f32 to vector<8x1xf32>
    %24 = arith.addf %23, %22 : vector<8x1xf32>
    %25 = arith.mulf %18, %24 : vector<8x1xf32>
    %cst_9 = arith.constant 1.000000e+00 : f32
    %26 = vector.broadcast %cst_9 : f32 to vector<8x1xf32>
    %27 = arith.addf %26, %25 : vector<8x1xf32>
    %28 = arith.mulf %20, %27 : vector<8x1xf32>
    %cst_10 = arith.constant -0.00999999977 : f32
    %29 = vector.broadcast %cst_10 : f32 to vector<8x1xf32>
    %30 = arith.cmpf ogt, %18, %29 : vector<8x1xf32>
    %31 = math.exp %18 : vector<8x1xf32>
    %cst_11 = arith.constant 1.000000e+00 : f32
    %32 = vector.broadcast %cst_11 : f32 to vector<8x1xf32>
    %33 = arith.subf %32, %31 : vector<8x1xf32>
    %34 = arith.select %30, %28, %33 : vector<8x1xi1>, vector<8x1xf32>
    %cst_12 = arith.constant 1.000000e+00 : f32
    %35 = vector.broadcast %cst_12 : f32 to vector<8x1xf32>
    %36 = arith.mulf %35, %34 : vector<8x1xf32>
    %37 = arith.mulf %36, %34 : vector<8x1xf32>
    %cst_13 = arith.constant 0.000000e+00 : f32
    %38 = vector.broadcast %cst_13 : f32 to vector<8x1xf32>
    %39 = arith.subf %38, %37 : vector<8x1xf32>
    %40 = arith.mulf %39, %18 : vector<8x1xf32>
    %c0_14 = arith.constant 0 : index
    %c0_15 = arith.constant 0 : index
    %41 = vector.load %arg3[%c0_14, %c0_15] : memref<8x1xf32, #tpu.memory_space<vmem>>, vector<8x1xf32>
    tpu.vector_store %arg3[%c0_14, %c0_15], %40 {strides = array<i32>} : memref<8x1xf32, #tpu.memory_space<vmem>>, vector<8x1xf32>,
    return
  }
  func.func @transform_0(%arg0: i32) -> (i32, i32) {
    %c0_i32 = arith.constant 0 : i32
    %c0_i32_0 = arith.constant 0 : i32
    return %arg0, %c0_i32 : i32, i32
  }
  func.func @transform_1(%arg0: i32) -> (i32, i32) {
    %c0_i32 = arith.constant 0 : i32
    %c0_i32_0 = arith.constant 0 : i32
    return %arg0, %c0_i32 : i32, i32
  }
  func.func @transform_2(%arg0: i32) -> (i32, i32) {
    %c0_i32 = arith.constant 0 : i32
    %c0_i32_0 = arith.constant 0 : i32
    return %arg0, %c0_i32 : i32, i32
  }
}

</mosaic_0001>

<llo_original>
// kernel: tpu_custom_call.1
$region0: #{tpu_custom_call.1}
  #allocation0 [shape = 'u32[]', space=smem, size = 0x4, offset = 0x4, fixed_abs, tag = 'smem constant byte address 0x4 - core index']
  #allocation1 [shape = 'u32[144,128]{1,0:T(1,128)}', space=vmem, size = 0x12000, scoped, tag = 'internal scratch']
  %s0 = inlined_call_operand.vmem [shape: f32[8,32], index: 0, kind: input, shape index: {}]
  %s1 = inlined_call_operand.vmem [shape: s32[8,1], index: 1, kind: input, shape index: {}]
  %s2 = inlined_call_operand.vmem [shape: f32[8,1], index: 2, kind: output, shape index: {}]
  %s3 = sld [smem:[#allocation0]]
  $region18: #{tpu_custom_call.1} parent=0
    _
  %s5 = ssub.s32 1, %s3
  %s6 = scalar_select 0, %s5, %s3
  // Predicated region
  $region2: #{tpu_custom_call.1} parent=0 // pred_check
    _
  $region3: #{tpu_custom_call.1} parent=0 // pred_check_branch
    %8 = sbr.rel (0) target = $region5
  $region4: #{tpu_custom_call.1} parent=0 // pred_region
    _
  $region5: #{tpu_custom_call.1} parent=0 // pred_fallthru
    _
  // Predicated region
  $region6: #{tpu_custom_call.1} parent=0 // pred_check
    _
  $region7: #{tpu_custom_call.1} parent=0 // pred_check_branch
    %10 = sbr.rel (0) target = $region9
  $region8: #{tpu_custom_call.1} parent=0 // pred_region
    _
  $region9: #{tpu_custom_call.1} parent=0 // pred_fallthru
    _
  %v11 = vld [vmem:[%s0] sm:$0xff]
  %v12 = vld [vmem:[%s1] sm:$0xff]
  %vm13 = vcmask 261120
  %v14 = vsel %vm13, %v11, -inf
  %15 = vmax.xlane.f32.xlu0 %v14
  %v16 = vpop.xlane.xlu0 %15
  %v17 = vsub.f32 %v11, %v16
  %v18 = vmul.f32 %v17, 1.442695
  %v19 = vpow.pop %v18
  %v20 = vsel %vm13, %v19, 0.0
  %21 = vadd.xlane.f32.xlu0 %v20
  %v22 = vpop.xlane.xlu0 %21
  %v23 = vlog2.pop %v22
  %v24 = vmul.f32 %v23, 0.6931472
  %v25 = vadd.f32 %v16, %v24
  %v26 = vlaneseq
  %v27 = vand.u32 %v26, 127
  %28 = vset.pattern.permute.xlu0 0
  %29 = vperm.xlu0 %28, %v12
  %v30 = vpop.permute.xlu0 %29
  %vm31 = vcmp.eq.s32.totalorder %v27, %v30
  %v32 = vsel %vm31, %v11, 0.0
  %v33 = vsel %vm13, %v32, 0.0
  %34 = vadd.xlane.f32.xlu0 %v33
  %v35 = vpop.xlane.xlu0 %34
  %v36 = vsub.f32 %v35, %v25
  %v37 = vsub.f32 0.0, %v36
  %v38 = vmul.f32 %v36, 0.16666667
  %v39 = vadd.f32 %v38, 0.5
  %v40 = vmul.f32 %v36, %v39
  %v41 = vadd.f32 %v40, 1.0
  %v42 = vmul.f32 %v37, %v41
  %vm43 = vcmp.gt.f32.partialorder %v36, -0.01
  %v44 = vmul.f32 %v36, 1.442695
  %v45 = vpow.pop %v44
  %v46 = vsub.f32 1.0, %v45
  %v47 = vsel %vm43, %v42, %v46
  %v48 = vmul.f32 %v47, %v47
  %v49 = vsub.f32 0.0, %v48
  %v50 = vmul.f32 %v49, %v36
  %vm51 = vcmask 7168
  %52 = vst.msk [vmem:[%s2] sm:$0xff] %vm51, %v50
  // Predicated region
  $region10: #{tpu_custom_call.1} parent=0 // pred_check
    _
  $region11: #{tpu_custom_call.1} parent=0 // pred_check_branch
    %54 = sbr.rel (0) target = $region13
  $region12: #{tpu_custom_call.1} parent=0 // pred_region
    _
  $region13: #{tpu_custom_call.1} parent=0 // pred_fallthru
    _
  // Predicated region
  $region14: #{tpu_custom_call.1} parent=0 // pred_check
    _
  $region15: #{tpu_custom_call.1} parent=0 // pred_check_branch
    %56 = sbr.rel (0) target = $region17
  $region16: #{tpu_custom_call.1} parent=0 // pred_region
    _
  $region17: #{tpu_custom_call.1} parent=0 // pred_fallthru
    _

</llo_original>
